<compile_context>
chip_gen: v7x
topology: tpu7x:2x2x1
jax: 0.10.0
libtpu: 0.0.40
codegen_flags: <defaults>
</compile_context>

<pallas_src>
import functools

import jax
import jax.numpy as jnp
from jax import lax
from jax.experimental import pallas as pl
from jax.experimental.pallas import tpu as pltpu


def _round_up(x, m):
    return (x + m - 1) // m * m


# ---------------------------------------------------------------------------
# Pallas kernels
# ---------------------------------------------------------------------------
def _gemm_bn_act_kernel(x_ref, w_ref, scale_ref, shift_ref, o_ref, *, act):
    """One fused step: (patches @ W) * scale + shift, then activation."""
    y = jnp.dot(x_ref[...], w_ref[...], preferred_element_type=jnp.float32)
    y = y * scale_ref[...] + shift_ref[...]
    if act == "leaky_relu":
        y = jnp.where(y > 0, y, 0.2 * y)          # LeakyReLU(0.2)
    elif act == "relu":
        y = jnp.maximum(y, 0.0)
    elif act == "sigmoid":
        y = 1.0 / (1.0 + jnp.exp(-y))
    o_ref[...] = y.astype(o_ref.dtype)


def _affine_kernel(x_ref, scale_ref, shift_ref, o_ref):
    """Per-row (= per-channel) affine: the standalone input BatchNorm2d(2)."""
    o_ref[...] = x_ref[...] * scale_ref[...] + shift_ref[...]


def _maxpool_dense_kernel(x_ref, o_ref, *, k):
    """Dense (stride-1) k x k max over a -inf padded input block."""
    hd = o_ref.shape[1]
    wd = o_ref.shape[2]
    x = x_ref[...]
    acc = x[:, 0:hd, 0:wd]
    for i in range(k):
        for j in range(k):
            if i == 0 and j == 0:
                continue
            acc = jnp.maximum(acc, x[:, i:i + hd, j:j + wd])
    o_ref[...] = acc


# ---------------------------------------------------------------------------
# Pallas wrappers
# ---------------------------------------------------------------------------
def _fused_gemm_bn_act(patches, w_flat, scale, shift, act, tile_m=256):
    """act((patches @ w_flat) * scale + shift) with lane-dense padded output."""
    M, K = patches.shape
    Cout = w_flat.shape[1]
    Np = _round_up(Cout, 128)          # lane-dense output -> unmasked stores
    Kp = _round_up(K, 8)
    Mp = _round_up(M, 8)
    tm = min(tile_m, Mp)               # whole problem in one step when tiny
    Mp = _round_up(Mp, tm)

    x = jnp.pad(patches, ((0, Mp - M), (0, Kp - K)))
    w = jnp.pad(w_flat, ((0, Kp - K), (0, Np - Cout)))
    sc = jnp.pad(scale.reshape(1, Cout).astype(jnp.float32),
                 ((0, 0), (0, Np - Cout)), constant_values=1.0)
    sh = jnp.pad(shift.reshape(1, Cout).astype(jnp.float32),
                 ((0, 0), (0, Np - Cout)))

    out = pl.pallas_call(
        functools.partial(_gemm_bn_act_kernel, act=act),
        out_shape=jax.ShapeDtypeStruct((Mp, Np), jnp.float32),
        grid_spec=pltpu.PrefetchScalarGridSpec(
            num_scalar_prefetch=0,
            grid=(Mp // tm,),
            in_specs=[
                pl.BlockSpec((tm, Kp), lambda i: (i, 0)),      # patch tile
                pl.BlockSpec((Kp, Np), lambda i: (0, 0)),      # resident weight
                pl.BlockSpec((1, Np), lambda i: (0, 0)),       # BN scale
                pl.BlockSpec((1, Np), lambda i: (0, 0)),       # BN shift
            ],
            out_specs=pl.BlockSpec((tm, Np), lambda i: (i, 0)),
        ),
        compiler_params=pltpu.CompilerParams(
            dimension_semantics=("parallel",)),   # megacore sharding on v7x
    )(x, w, sc, sh)
    return out[:M, :Cout]


def _bn2d_input(x, scale, shift):
    """Standalone BatchNorm2d (eval) as a single-step Pallas affine kernel."""
    B, C, H, W = x.shape
    xc = x.transpose(1, 0, 2, 3).reshape(C, B * H * W)   # lane-dense columns
    out = pl.pallas_call(
        _affine_kernel,
        out_shape=jax.ShapeDtypeStruct(xc.shape, x.dtype),
    )(xc, scale.reshape(C, 1).astype(x.dtype), shift.reshape(C, 1).astype(x.dtype))
    return out.reshape(C, B, H, W).transpose(1, 0, 2, 3)


def _maxpool2d(x, k, stride, pad):
    """PyTorch MaxPool2d(k, stride, pad): Pallas dense max + wrapper subsample."""
    B, C, H, W = x.shape
    xp = jnp.pad(x, ((0, 0), (0, 0), (pad, pad), (pad, pad)),
                 constant_values=-jnp.inf)
    Hp, Wp = H + 2 * pad, W + 2 * pad
    Hd, Wd = Hp - k + 1, Wp - k + 1
    dense = pl.pallas_call(
        functools.partial(_maxpool_dense_kernel, k=k),
        out_shape=jax.ShapeDtypeStruct((B * C, Hd, Wd), x.dtype),
    )(xp.reshape(B * C, Hp, Wp))
    # stride subsample (pure layout) -> exactly floor((H + 2p - k)/s) + 1 rows
    out = dense[:, ::stride, ::stride]
    return out.reshape(B, C, (Hd - 1) // stride + 1, (Wd - 1) // stride + 1)


# ---------------------------------------------------------------------------
# Layout plumbing (XLA wrapper side)
# ---------------------------------------------------------------------------
def _im2col(xp, kh, kw, stride):
    """xp: (B, C, Hp, Wp) already padded.  Returns (B*Ho*Wo, C*kh*kw), Ho, Wo.
    Feature order (C, kh, kw) matches PyTorch weight.reshape(Cout, -1)."""
    B, C, Hp, Wp = xp.shape
    Ho = (Hp - kh) // stride + 1
    Wo = (Wp - kw) // stride + 1
    rows = jnp.stack(
        [xp[:, :, i:i + stride * (Ho - 1) + 1:stride, :] for i in range(kh)],
        axis=0)                                          # (kh, B, C, Ho, Wp)
    cols = jnp.stack(
        [rows[..., j:j + stride * (Wo - 1) + 1:stride] for j in range(kw)],
        axis=0)                                          # (kw, kh, B, C, Ho, Wo)
    p = cols.transpose(2, 4, 5, 3, 1, 0)                 # (B, Ho, Wo, C, kh, kw)
    return p.reshape(B * Ho * Wo, C * kh * kw), Ho, Wo


def _dilate_and_edge(x, stride, ph, pw):
    """Insert (stride-1) zeros between spatial elements, then pad (>=0) or crop (<0)."""
    if stride > 1:
        x = lax.pad(x, jnp.array(0, x.dtype),
                    ((0, 0, 0), (0, 0, 0), (0, 0, stride - 1), (0, 0, stride - 1)))
    if ph > 0 or pw > 0:
        x = jnp.pad(x, ((0, 0), (0, 0),
                        (max(ph, 0), max(ph, 0)), (max(pw, 0), max(pw, 0))))
    if ph < 0:
        x = x[:, :, -ph:x.shape[2] + ph, :]
    if pw < 0:
        x = x[:, :, :, -pw:x.shape[3] + pw]
    return x


def _fold_bn(bn, eps=1e-5):
    scale = bn["gamma"] / jnp.sqrt(bn["var"] + eps)
    shift = bn["beta"] - bn["mean"] * scale
    return scale, shift


def _conv2d_bn_act(x, w, bn_scale, bn_shift, stride, pad, act):
    B, Cin, H, W = x.shape
    Cout, _, kh, kw = w.shape
    xp = jnp.pad(x, ((0, 0), (0, 0), (pad, pad), (pad, pad)))
    patches, Ho, Wo = _im2col(xp, kh, kw, stride)
    w_flat = w.reshape(Cout, Cin * kh * kw).T
    out = _fused_gemm_bn_act(patches, w_flat, bn_scale, bn_shift, act)
    return out.reshape(B, Ho, Wo, Cout).transpose(0, 3, 1, 2)


def _convT2d_bn_act(x, w, bn_scale, bn_shift, stride, pad, act):
    # PyTorch ConvTranspose2d weight layout: (Cin, Cout, kh, kw)
    Cin, Cout, kh, kw = w.shape
    xd = _dilate_and_edge(x, stride, kh - 1 - pad, kw - 1 - pad)
    w_eq = jnp.flip(w, (2, 3)).transpose(1, 0, 2, 3)     # (Cout, Cin, kh, kw)
    patches, Ho, Wo = _im2col(xd, kh, kw, 1)
    w_flat = w_eq.reshape(Cout, Cin * kh * kw).T
    out = _fused_gemm_bn_act(patches, w_flat, bn_scale, bn_shift, act)
    return out.reshape(x.shape[0], Ho, Wo, Cout).transpose(0, 3, 1, 2)


# ---------------------------------------------------------------------------
# Full CL_maxPool forward (eval mode)
# ---------------------------------------------------------------------------
def cl_maxpool_forward(x, params):
    s0, b0 = _fold_bn(params["bn0"])
    h = _bn2d_input(x, s0, b0)

    enc = params["enc"]
    s, b = _fold_bn(enc[0]["bn"])
    h = _conv2d_bn_act(h, enc[0]["w"], s, b, enc[0]["stride"], enc[0]["pad"],
                       "leaky_relu")
    h = _maxpool2d(h, 5, 2, 1)
    s, b = _fold_bn(enc[1]["bn"])
    h = _conv2d_bn_act(h, enc[1]["w"], s, b, enc[1]["stride"], enc[1]["pad"],
                       "leaky_relu")
    h = _maxpool2d(h, 4, 1, 1)
    for layer in enc[2:]:
        s, b = _fold_bn(layer["bn"])
        h = _conv2d_bn_act(h, layer["w"], s, b, layer["stride"], layer["pad"],
                           "leaky_relu")

    dec = params["dec"]
    for i, layer in enumerate(dec):
        s, b = _fold_bn(layer["bn"])
        act = "sigmoid" if i == len(dec) - 1 else "relu"
        h = _convT2d_bn_act(h, layer["w"], s, b, layer["stride"], layer["pad"], act)
    return h


def init_cl_maxpool_params(key, channel_mult, h_kernel, w_kernel):
    cm = channel_mult
    enc_cfg = [
        dict(cin=2,      cout=cm,     k=(10, 11), stride=2, pad=1),
        dict(cin=cm,     cout=2 * cm, k=(10, 11), stride=2, pad=1),
        dict(cin=2 * cm, cout=4 * cm, k=(10, 11), stride=2, pad=1),
        dict(cin=4 * cm, cout=1,      k=(1, 1),   stride=2, pad=1),
    ]
    dec_cfg = [
        dict(cin=1,      cout=4 * cm, k=(1, 1),                stride=2, pad=1),
        dict(cin=4 * cm, cout=2 * cm, k=(10, 11),              stride=2, pad=1),
        dict(cin=2 * cm, cout=2 * cm, k=(4, 4),                stride=1, pad=1),
        dict(cin=2 * cm, cout=cm,     k=(10, 11),              stride=2, pad=1),
        dict(cin=cm,     cout=cm,     k=(5, 5),                stride=2, pad=1),
        dict(cin=cm,     cout=2,      k=(h_kernel, w_kernel),  stride=2, pad=1),
    ]

    def bn_params(k, c):
        k1, k2, k3, k4 = jax.random.split(k, 4)
        return dict(
            gamma=jax.random.uniform(k1, (c,), jnp.float32, 0.5, 1.5),
            beta=0.1 * jax.random.normal(k2, (c,), jnp.float32),
            mean=0.1 * jax.random.normal(k3, (c,), jnp.float32),
            var=jax.random.uniform(k4, (c,), jnp.float32, 0.5, 1.5),
        )

    keys = jax.random.split(key, 1 + len(enc_cfg) + len(dec_cfg))
    params = dict(bn0=bn_params(keys[0], 2), enc=[], dec=[])
    idx = 1
    for cfg in enc_cfg:
        k_w, k_b = jax.random.split(keys[idx]); idx += 1
        fan_in = cfg["cin"] * cfg["k"][0] * cfg["k"][1]
        bound = 1.0 / (fan_in ** 0.5)
        w = jax.random.uniform(k_w, (cfg["cout"], cfg["cin"], *cfg["k"]),
                               jnp.float32, -bound, bound)
        params["enc"].append(dict(w=w, bn=bn_params(k_b, cfg["cout"]),
                                  stride=cfg["stride"], pad=cfg["pad"]))
    for cfg in dec_cfg:
        k_w, k_b = jax.random.split(keys[idx]); idx += 1
        fan_in = cfg["cin"] * cfg["k"][0] * cfg["k"][1]
        bound = 1.0 / (fan_in ** 0.5)
        # ConvTranspose2d weight layout: (in_channels, out_channels, kh, kw)
        w = jax.random.uniform(k_w, (cfg["cin"], cfg["cout"], *cfg["k"]),
                               jnp.float32, -bound, bound)
        params["dec"].append(dict(w=w, bn=bn_params(k_b, cfg["cout"]),
                                  stride=cfg["stride"], pad=cfg["pad"]))
    return params


# ---------------------------------------------------------------------------
# Pure-XLA reference (for the in-script correctness check)
# ---------------------------------------------------------------------------
def _reference_forward(x, params):
    dn = ("NCHW", "OIHW", "NCHW")

    def bn(h, p):
        s, b = _fold_bn(p)
        return h * s[None, :, None, None] + b[None, :, None, None]

    def conv(h, w, stride, pad):
        return lax.conv_general_dilated(h, w, (stride, stride),
                                        ((pad, pad), (pad, pad)),
                                        dimension_numbers=dn)

    def convT(h, w, stride, pad):
        kh, kw = w.shape[2], w.shape[3]
        w_eq = jnp.flip(w, (2, 3)).transpose(1, 0, 2, 3)
        hd = _dilate_and_edge(h, stride, kh - 1 - pad, kw - 1 - pad)
        return lax.conv_general_dilated(hd, w_eq, (1, 1), "VALID",
                                        dimension_numbers=dn)

    def maxpool(h, k, s, p):
        return lax.reduce_window(h, -jnp.inf, lax.max, (1, 1, k, k),
                                 (1, 1, s, s), ((0, 0), (0, 0), (p, p), (p, p)))

    def lrelu(h):
        return jnp.where(h > 0, h, 0.2 * h)

    h = bn(x, params["bn0"])
    e = params["enc"]
    h = lrelu(bn(conv(h, e[0]["w"], e[0]["stride"], e[0]["pad"]), e[0]["bn"]))
    h = maxpool(h, 5, 2, 1)
    h = lrelu(bn(conv(h, e[1]["w"], e[1]["stride"], e[1]["pad"]), e[1]["bn"]))
    h = maxpool(h, 4, 1, 1)
    for layer in e[2:]:
        h = lrelu(bn(conv(h, layer["w"], layer["stride"], layer["pad"]), layer["bn"]))
    d = params["dec"]
    for i, layer in enumerate(d):
        h = bn(convT(h, layer["w"], layer["stride"], layer["pad"]), layer["bn"])
        h = jax.nn.sigmoid(h) if i == len(d) - 1 else jnp.maximum(h, 0.0)
    return h


if __name__ == "__main__":
    # 128x128 is (roughly) the smallest spatial size that survives the
    # (10,11)-kernel / stride-2 encoder; h_kernel=34, w_kernel=22 make the
    # decoder reconstruct the full 128x128 input.
    channel_mult, h_kernel, w_kernel = 4, 34, 22
    B, H, W = 2, 128, 128

    key = jax.random.PRNGKey(0)
    kx, kp = jax.random.split(key)
    x = jax.random.normal(kx, (B, 2, H, W), jnp.float32)
    params = init_cl_maxpool_params(kp, channel_mult, h_kernel, w_kernel)

    out = jax.block_until_ready(cl_maxpool_forward(x, params))
    ref = jax.block_until_ready(_reference_forward(x, params))

    assert out.shape == ref.shape == (B, 2, H, W), (out.shape, ref.shape)
    assert bool(jnp.all(jnp.isfinite(out)))
    max_err = float(jnp.max(jnp.abs(out - ref)))
    # tolerance covers MXU bf16-pass rounding differences vs the XLA conv path
    assert max_err < 3e-2, f"max abs err {max_err}"

    print("KERNEL_OK")
</pallas_src>

<mosaic_0001>
module attributes {stable_mosaic.version = 11 : i64} {
  func.func @_affine_kernel(%arg0: memref<2x32768xf32, #tpu.memory_space<vmem>>, %arg1: memref<2x1xf32, #tpu.memory_space<vmem>>, %arg2: memref<2x1xf32, #tpu.memory_space<vmem>>, %arg3: memref<2x32768xf32, #tpu.memory_space<vmem>>) attributes {dimension_semantics = [], scalar_prefetch = 0 : i64, scratch_operands = 0 : i64, tpu.core_type = #tpu.core_type<tc>} {
    %c0 = arith.constant 0 : index
    %c0_0 = arith.constant 0 : index
    %0 = vector.load %arg0[%c0, %c0_0] : memref<2x32768xf32, #tpu.memory_space<vmem>>, vector<2x32768xf32>
    %c0_1 = arith.constant 0 : index
    %c0_2 = arith.constant 0 : index
    %1 = vector.load %arg1[%c0_1, %c0_2] : memref<2x1xf32, #tpu.memory_space<vmem>>, vector<2x1xf32>
    %2 = vector.broadcast %1 : vector<2x1xf32> to vector<2x32768xf32>
    %3 = arith.mulf %0, %2 : vector<2x32768xf32>
    %c0_3 = arith.constant 0 : index
    %c0_4 = arith.constant 0 : index
    %4 = vector.load %arg2[%c0_3, %c0_4] : memref<2x1xf32, #tpu.memory_space<vmem>>, vector<2x1xf32>
    %5 = vector.broadcast %4 : vector<2x1xf32> to vector<2x32768xf32>
    %6 = arith.addf %3, %5 : vector<2x32768xf32>
    %c0_5 = arith.constant 0 : index
    %c0_6 = arith.constant 0 : index
    %7 = vector.load %arg3[%c0_5, %c0_6] : memref<2x32768xf32, #tpu.memory_space<vmem>>, vector<2x32768xf32>
    tpu.vector_store %arg3[%c0_5, %c0_6], %6 {strides = array<i32>} : memref<2x32768xf32, #tpu.memory_space<vmem>>, vector<2x32768xf32>,
    return
  }
}

</mosaic_0001>

<llo_original>
// kernel: tpu_custom_call.1
$region0: #{tpu_custom_call.1}
  #allocation0 [shape = 'u32[]', space=smem, size = 0x4, offset = 0x4, fixed_abs, tag = 'smem constant byte address 0x4 - core index']
  #allocation1 [shape = 'u32[144,128]{1,0:T(1,128)}', space=vmem, size = 0x12000, scoped, tag = 'internal scratch']
  %s0 = inlined_call_operand.hbm [shape: f32[2,32768], index: 0, kind: input, shape index: {}]
  %s1 = inlined_call_operand.vmem [shape: f32[2,1], index: 1, kind: input, shape index: {}]
  %s2 = inlined_call_operand.vmem [shape: f32[2,1], index: 2, kind: input, shape index: {}]
  %s3 = inlined_call_operand.hbm [shape: f32[2,32768], index: 3, kind: output, shape index: {}]
  %s4 = sld [smem:[#allocation0]]
  $region26: #{tpu_custom_call.1} parent=0
    _
  %s6 = ssub.s32 1, %s4
  %s7 = scalar_select 0, %s6, %s4
  $region1: #{tpu_custom_call.1} parent=0
    #allocation2 [shape = 'u8[262144]{0}', space=vmem, size = 0x40000, scoped, tag = 'input window, operand 0, single buffered']
    #allocation3 [shape = 's32[1]{0}', space=sflag, size = 0x4, scoped, tag = 'scoped memory for tpu_custom_call.1']
    #allocation4 [shape = 's32[1]{0}', space=sflag, size = 0x4, scoped, tag = 'scoped memory for tpu_custom_call.1']
    #allocation5 [shape = 'u8[262144]{0}', space=vmem, size = 0x40000, scoped, tag = 'output window, operand 0, single buffered']
    %8 = vsyncpa [#allocation3], 0
    %9 = vsyncpa [#allocation4], 0
    // Predicated region
    $region2: #{tpu_custom_call.1} parent=1 // pred_check
      _
    $region3: #{tpu_custom_call.1} parent=1 // pred_check_branch
      %11 = sbr.rel (0) target = $region5
    $region4: #{tpu_custom_call.1} parent=1 // pred_region
      %s13 = ssub.s32 8192, 8192
      %14 = vsyncadd [#allocation3], %s13
      %s16 = sshll.u32 [#allocation2], 4
      %s17 = int_to_ptr.vmem [resolvable:$true] %s16
      %19 = dma.hbm_to_vmem [thread:$0]  %s0, 8192, %s17, [#allocation3]
    $region5: #{tpu_custom_call.1} parent=1 // pred_fallthru
      _
    // Predicated region
    $region6: #{tpu_custom_call.1} parent=1 // pred_check
      _
    $region7: #{tpu_custom_call.1} parent=1 // pred_check_branch
      %21 = sbr.rel (0) target = $region9
    $region8: #{tpu_custom_call.1} parent=1 // pred_region
      _
    $region9: #{tpu_custom_call.1} parent=1 // pred_fallthru
      _
    // Predicated region
    $region10: #{tpu_custom_call.1} parent=1 // pred_check
      _
    $region11: #{tpu_custom_call.1} parent=1 // pred_check_branch
      %23 = sbr.rel (0) target = $region13
    $region12: #{tpu_custom_call.1} parent=1 // pred_region
      _
    $region13: #{tpu_custom_call.1} parent=1 // pred_fallthru
      _
    // Predicated region
    $region14: #{tpu_custom_call.1} parent=1 // pred_check
      _
    $region15: #{tpu_custom_call.1} parent=1 // pred_check_branch
      %25 = sbr.rel (0) target = $region17
    $region16: #{tpu_custom_call.1} parent=1 // pred_region
      %26 = dma.done [#allocation3], 8192
    $region17: #{tpu_custom_call.1} parent=1 // pred_fallthru
      _
    %v27 = vld [vmem:[#allocation2] sm:$0xff]
    %v28 = vld [vmem:[#allocation2 + $0x8] sm:$0xff]
    %v29 = vld [vmem:[#allocation2 + $0x10] sm:$0xff]
    %v30 = vld [vmem:[#allocation2 + $0x18] sm:$0xff]
    %v31 = vld [vmem:[#allocation2 + $0x20] sm:$0xff]
    %v32 = vld [vmem:[#allocation2 + $0x28] sm:$0xff]
    %v33 = vld [vmem:[#allocation2 + $0x30] sm:$0xff]
    %v34 = vld [vmem:[#allocation2 + $0x38] sm:$0xff]
    %v35 = vld [vmem:[#allocation2 + $0x40] sm:$0xff]
    %v36 = vld [vmem:[#allocation2 + $0x48] sm:$0xff]
    %v37 = vld [vmem:[#allocation2 + $0x50] sm:$0xff]
    %v38 = vld [vmem:[#allocation2 + $0x58] sm:$0xff]
    %v39 = vld [vmem:[#allocation2 + $0x60] sm:$0xff]
    %v40 = vld [vmem:[#allocation2 + $0x68] sm:$0xff]
    %v41 = vld [vmem:[#allocation2 + $0x70] sm:$0xff]
    %v42 = vld [vmem:[#allocation2 + $0x78] sm:$0xff]
    %v43 = vld [vmem:[#allocation2 + $0x80] sm:$0xff]
    %v44 = vld [vmem:[#allocation2 + $0x88] sm:$0xff]
    %v45 = vld [vmem:[#allocation2 + $0x90] sm:$0xff]
    %v46 = vld [vmem:[#allocation2 + $0x98] sm:$0xff]
    %v47 = vld [vmem:[#allocation2 + $0xa0] sm:$0xff]
    %v48 = vld [vmem:[#allocation2 + $0xa8] sm:$0xff]
    %v49 = vld [vmem:[#allocation2 + $0xb0] sm:$0xff]
    %v50 = vld [vmem:[#allocation2 + $0xb8] sm:$0xff]
    %v51 = vld [vmem:[#allocation2 + $0xc0] sm:$0xff]
    %v52 = vld [vmem:[#allocation2 + $0xc8] sm:$0xff]
    %v53 = vld [vmem:[#allocation2 + $0xd0] sm:$0xff]
    %v54 = vld [vmem:[#allocation2 + $0xd8] sm:$0xff]
    %v55 = vld [vmem:[#allocation2 + $0xe0] sm:$0xff]
    %v56 = vld [vmem:[#allocation2 + $0xe8] sm:$0xff]
    %v57 = vld [vmem:[#allocation2 + $0xf0] sm:$0xff]
    %v58 = vld [vmem:[#allocation2 + $0xf8] sm:$0xff]
    %v59 = vld [vmem:[#allocation2 + $0x100] sm:$0xff]
    %v60 = vld [vmem:[#allocation2 + $0x108] sm:$0xff]
    %v61 = vld [vmem:[#allocation2 + $0x110] sm:$0xff]
    %v62 = vld [vmem:[#allocation2 + $0x118] sm:$0xff]
    %v63 = vld [vmem:[#allocation2 + $0x120] sm:$0xff]
    %v64 = vld [vmem:[#allocation2 + $0x128] sm:$0xff]
    %v65 = vld [vmem:[#allocation2 + $0x130] sm:$0xff]
    %v66 = vld [vmem:[#allocation2 + $0x138] sm:$0xff]
    %v67 = vld [vmem:[#allocation2 + $0x140] sm:$0xff]
    %v68 = vld [vmem:[#allocation2 + $0x148] sm:$0xff]
    %v69 = vld [vmem:[#allocation2 + $0x150] sm:$0xff]
    %v70 = vld [vmem:[#allocation2 + $0x158] sm:$0xff]
    %v71 = vld [vmem:[#allocation2 + $0x160] sm:$0xff]
    %v72 = vld [vmem:[#allocation2 + $0x168] sm:$0xff]
    %v73 = vld [vmem:[#allocation2 + $0x170] sm:$0xff]
    %v74 = vld [vmem:[#allocation2 + $0x178] sm:$0xff]
    %v75 = vld [vmem:[#allocation2 + $0x180] sm:$0xff]
    %v76 = vld [vmem:[#allocation2 + $0x188] sm:$0xff]
    %v77 = vld [vmem:[#allocation2 + $0x190] sm:$0xff]
    %v78 = vld [vmem:[#allocation2 + $0x198] sm:$0xff]
    %v79 = vld [vmem:[#allocation2 + $0x1a0] sm:$0xff]
    %v80 = vld [vmem:[#allocation2 + $0x1a8] sm:$0xff]
    %v81 = vld [vmem:[#allocation2 + $0x1b0] sm:$0xff]
    %v82 = vld [vmem:[#allocation2 + $0x1b8] sm:$0xff]
    %v83 = vld [vmem:[#allocation2 + $0x1c0] sm:$0xff]
    %v84 = vld [vmem:[#allocation2 + $0x1c8] sm:$0xff]
    %v85 = vld [vmem:[#allocation2 + $0x1d0] sm:$0xff]
    %v86 = vld [vmem:[#allocation2 + $0x1d8] sm:$0xff]
    %v87 = vld [vmem:[#allocation2 + $0x1e0] sm:$0xff]
    %v88 = vld [vmem:[#allocation2 + $0x1e8] sm:$0xff]
    %v89 = vld [vmem:[#allocation2 + $0x1f0] sm:$0xff]
    %v90 = vld [vmem:[#allocation2 + $0x1f8] sm:$0xff]
    %v91 = vld [vmem:[%s1] sm:$0x3]
    %93 = vset.pattern.permute.xlu0 0
    %94 = vperm.xlu0 %93, %v91
    %v95 = vpop.permute.xlu0 %94
    %v97 = vunpack.c.l.s4 269488144
    %v98 = vunpack.c.0.s8 %v97
    %v99 = vlaneseq
    %v100 = vshrl.u32 %v99, 7
    %v101 = vsub.s32 %v98, %v100
    %v102 = vrot.slane %v95, %v101
    %v104 = vmul.f32 %v27, %v102
    %v105 = vmul.f32 %v28, %v102
    %v106 = vmul.f32 %v29, %v102
    %v107 = vmul.f32 %v30, %v102
    %v108 = vmul.f32 %v31, %v102
    %v109 = vmul.f32 %v32, %v102
    %v110 = vmul.f32 %v33, %v102
    %v111 = vmul.f32 %v34, %v102
    %v112 = vmul.f32 %v35, %v102
    %v113 = vmul.f32 %v36, %v102
    %v114 = vmul.f32 %v37, %v102
    %v115 = vmul.f32 %v38, %v102
    %v116 = vmul.f32 %v39, %v102
    %v117 = vmul.f32 %v40, %v102
    %v118 = vmul.f32 %v41, %v102
    %v119 = vmul.f32 %v42, %v102
    %v120 = vmul.f32 %v43, %v102
    %v121 = vmul.f32 %v44, %v102
    %v122 = vmul.f32 %v45, %v102
    %v123 = vmul.f32 %v46, %v102
    %v124 = vmul.f32 %v47, %v102
    %v125 = vmul.f32 %v48, %v102
    %v126 = vmul.f32 %v49, %v102
    %v127 = vmul.f32 %v50, %v102
    %v128 = vmul.f32 %v51, %v102
    %v129 = vmul.f32 %v52, %v102
    %v130 = vmul.f32 %v53, %v102
    %v131 = vmul.f32 %v54, %v102
    %v132 = vmul.f32 %v55, %v102
    %v133 = vmul.f32 %v56, %v102
    %v134 = vmul.f32 %v57, %v102
    %v135 = vmul.f32 %v58, %v102
    %v136 = vmul.f32 %v59, %v102
    %v137 = vmul.f32 %v60, %v102
    %v138 = vmul.f32 %v61, %v102
    %v139 = vmul.f32 %v62, %v102
    %v140 = vmul.f32 %v63, %v102
    %v141 = vmul.f32 %v64, %v102
    %v142 = vmul.f32 %v65, %v102
    %v143 = vmul.f32 %v66, %v102
    %v144 = vmul.f32 %v67, %v102
    %v145 = vmul.f32 %v68, %v102
    %v146 = vmul.f32 %v69, %v102
    %v147 = vmul.f32 %v70, %v102
    %v148 = vmul.f32 %v71, %v102
    %v149 = vmul.f32 %v72, %v102
    %v150 = vmul.f32 %v73, %v102
    %v151 = vmul.f32 %v74, %v102
    %v152 = vmul.f32 %v75, %v102
    %v153 = vmul.f32 %v76, %v102
    %v154 = vmul.f32 %v77, %v102
    %v155 = vmul.f32 %v78, %v102
    %v156 = vmul.f32 %v79, %v102
    %v157 = vmul.f32 %v80, %v102
    %v158 = vmul.f32 %v81, %v102
    %v159 = vmul.f32 %v82, %v102
    %v160 = vmul.f32 %v83, %v102
    %v161 = vmul.f32 %v84, %v102
    %v162 = vmul.f32 %v85, %v102
    %v163 = vmul.f32 %v86, %v102
    %v164 = vmul.f32 %v87, %v102
    %v165 = vmul.f32 %v88, %v102
    %v166 = vmul.f32 %v89, %v102
    %v167 = vmul.f32 %v90, %v102
    %v168 = vld [vmem:[%s2] sm:$0x3]
    %170 = vset.pattern.permute.xlu0 0
    %171 = vperm.xlu0 %170, %v168
    %v172 = vpop.permute.xlu0 %171
    %v174 = vunpack.c.l.s4 269488144
    %v175 = vunpack.c.0.s8 %v174
    %v176 = vlaneseq
    %v177 = vshrl.u32 %v176, 7
    %v178 = vsub.s32 %v175, %v177
    %v179 = vrot.slane %v172, %v178
    %v181 = vadd.f32 %v104, %v179
    %v182 = vadd.f32 %v105, %v179
    %v183 = vadd.f32 %v106, %v179
    %v184 = vadd.f32 %v107, %v179
    %v185 = vadd.f32 %v108, %v179
    %v186 = vadd.f32 %v109, %v179
    %v187 = vadd.f32 %v110, %v179
    %v188 = vadd.f32 %v111, %v179
    %v189 = vadd.f32 %v112, %v179
    %v190 = vadd.f32 %v113, %v179
    %v191 = vadd.f32 %v114, %v179
    %v192 = vadd.f32 %v115, %v179
    %v193 = vadd.f32 %v116, %v179
    %v194 = vadd.f32 %v117, %v179
    %v195 = vadd.f32 %v118, %v179
    %v196 = vadd.f32 %v119, %v179
    %v197 = vadd.f32 %v120, %v179
    %v198 = vadd.f32 %v121, %v179
    %v199 = vadd.f32 %v122, %v179
    %v200 = vadd.f32 %v123, %v179
    %v201 = vadd.f32 %v124, %v179
    %v202 = vadd.f32 %v125, %v179
    %v203 = vadd.f32 %v126, %v179
    %v204 = vadd.f32 %v127, %v179
    %v205 = vadd.f32 %v128, %v179
    %v206 = vadd.f32 %v129, %v179
    %v207 = vadd.f32 %v130, %v179
    %v208 = vadd.f32 %v131, %v179
    %v209 = vadd.f32 %v132, %v179
    %v210 = vadd.f32 %v133, %v179
    %v211 = vadd.f32 %v134, %v179
    %v212 = vadd.f32 %v135, %v179
    %v213 = vadd.f32 %v136, %v179
    %v214 = vadd.f32 %v137, %v179
    %v215 = vadd.f32 %v138, %v179
    %v216 = vadd.f32 %v139, %v179
    %v217 = vadd.f32 %v140, %v179
    %v218 = vadd.f32 %v141, %v179
    %v219 = vadd.f32 %v142, %v179
    %v220 = vadd.f32 %v143, %v179
    %v221 = vadd.f32 %v144, %v179
    %v222 = vadd.f32 %v145, %v179
    %v223 = vadd.f32 %v146, %v179
    %v224 = vadd.f32 %v147, %v179
    %v225 = vadd.f32 %v148, %v179
    %v226 = vadd.f32 %v149, %v179
    %v227 = vadd.f32 %v150, %v179
    %v228 = vadd.f32 %v151, %v179
    %v229 = vadd.f32 %v152, %v179
    %v230 = vadd.f32 %v153, %v179
    %v231 = vadd.f32 %v154, %v179
    %v232 = vadd.f32 %v155, %v179
    %v233 = vadd.f32 %v156, %v179
    %v234 = vadd.f32 %v157, %v179
    %v235 = vadd.f32 %v158, %v179
    %v236 = vadd.f32 %v159, %v179
    %v237 = vadd.f32 %v160, %v179
    %v238 = vadd.f32 %v161, %v179
    %v239 = vadd.f32 %v162, %v179
    %v240 = vadd.f32 %v163, %v179
    %v241 = vadd.f32 %v164, %v179
    %v242 = vadd.f32 %v165, %v179
    %v243 = vadd.f32 %v166, %v179
    %v244 = vadd.f32 %v167, %v179
    %245 = vst [vmem:[#allocation5] sm:$0xff] %v181
    %246 = vst [vmem:[#allocation5 + $0x8] sm:$0xff] %v182
    %247 = vst [vmem:[#allocation5 + $0x10] sm:$0xff] %v183
    %248 = vst [vmem:[#allocation5 + $0x18] sm:$0xff] %v184
    %249 = vst [vmem:[#allocation5 + $0x20] sm:$0xff] %v185
    %250 = vst [vmem:[#allocation5 + $0x28] sm:$0xff] %v186
    %251 = vst [vmem:[#allocation5 + $0x30] sm:$0xff] %v187
    %252 = vst [vmem:[#allocation5 + $0x38] sm:$0xff] %v188
    %253 = vst [vmem:[#allocation5 + $0x40] sm:$0xff] %v189
    %254 = vst [vmem:[#allocation5 + $0x48] sm:$0xff] %v190
    %255 = vst [vmem:[#allocation5 + $0x50] sm:$0xff] %v191
    %256 = vst [vmem:[#allocation5 + $0x58] sm:$0xff] %v192
    %257 = vst [vmem:[#allocation5 + $0x60] sm:$0xff] %v193
    %258 = vst [vmem:[#allocation5 + $0x68] sm:$0xff] %v194
    %259 = vst [vmem:[#allocation5 + $0x70] sm:$0xff] %v195
    %260 = vst [vmem:[#allocation5 + $0x78] sm:$0xff] %v196
    %261 = vst [vmem:[#allocation5 + $0x80] sm:$0xff] %v197
    %262 = vst [vmem:[#allocation5 + $0x88] sm:$0xff] %v198
    %263 = vst [vmem:[#allocation5 + $0x90] sm:$0xff] %v199
    %264 = vst [vmem:[#allocation5 + $0x98] sm:$0xff] %v200
    %265 = vst [vmem:[#allocation5 + $0xa0] sm:$0xff] %v201
    %266 = vst [vmem:[#allocation5 + $0xa8] sm:$0xff] %v202
    %267 = vst [vmem:[#allocation5 + $0xb0] sm:$0xff] %v203
    %268 = vst [vmem:[#allocation5 + $0xb8] sm:$0xff] %v204
    %269 = vst [vmem:[#allocation5 + $0xc0] sm:$0xff] %v205
    %270 = vst [vmem:[#allocation5 + $0xc8] sm:$0xff] %v206
    %271 = vst [vmem:[#allocation5 + $0xd0] sm:$0xff] %v207
    %272 = vst [vmem:[#allocation5 + $0xd8] sm:$0xff] %v208
    %273 = vst [vmem:[#allocation5 + $0xe0] sm:$0xff] %v209
    %274 = vst [vmem:[#allocation5 + $0xe8] sm:$0xff] %v210
    %275 = vst [vmem:[#allocation5 + $0xf0] sm:$0xff] %v211
    %276 = vst [vmem:[#allocation5 + $0xf8] sm:$0xff] %v212
    %277 = vst [vmem:[#allocation5 + $0x100] sm:$0xff] %v213
    %278 = vst [vmem:[#allocation5 + $0x108] sm:$0xff] %v214
    %279 = vst [vmem:[#allocation5 + $0x110] sm:$0xff] %v215
    %280 = vst [vmem:[#allocation5 + $0x118] sm:$0xff] %v216
    %281 = vst [vmem:[#allocation5 + $0x120] sm:$0xff] %v217
    %282 = vst [vmem:[#allocation5 + $0x128] sm:$0xff] %v218
    %283 = vst [vmem:[#allocation5 + $0x130] sm:$0xff] %v219
    %284 = vst [vmem:[#allocation5 + $0x138] sm:$0xff] %v220
    %285 = vst [vmem:[#allocation5 + $0x140] sm:$0xff] %v221
    %286 = vst [vmem:[#allocation5 + $0x148] sm:$0xff] %v222
    %287 = vst [vmem:[#allocation5 + $0x150] sm:$0xff] %v223
    %288 = vst [vmem:[#allocation5 + $0x158] sm:$0xff] %v224
    %289 = vst [vmem:[#allocation5 + $0x160] sm:$0xff] %v225
    %290 = vst [vmem:[#allocation5 + $0x168] sm:$0xff] %v226
    %291 = vst [vmem:[#allocation5 + $0x170] sm:$0xff] %v227
    %292 = vst [vmem:[#allocation5 + $0x178] sm:$0xff] %v228
    %293 = vst [vmem:[#allocation5 + $0x180] sm:$0xff] %v229
    %294 = vst [vmem:[#allocation5 + $0x188] sm:$0xff] %v230
    %295 = vst [vmem:[#allocation5 + $0x190] sm:$0xff] %v231
    %296 = vst [vmem:[#allocation5 + $0x198] sm:$0xff] %v232
    %297 = vst [vmem:[#allocation5 + $0x1a0] sm:$0xff] %v233
    %298 = vst [vmem:[#allocation5 + $0x1a8] sm:$0xff] %v234
    %299 = vst [vmem:[#allocation5 + $0x1b0] sm:$0xff] %v235
    %300 = vst [vmem:[#allocation5 + $0x1b8] sm:$0xff] %v236
    %301 = vst [vmem:[#allocation5 + $0x1c0] sm:$0xff] %v237
    %302 = vst [vmem:[#allocation5 + $0x1c8] sm:$0xff] %v238
    %303 = vst [vmem:[#allocation5 + $0x1d0] sm:$0xff] %v239
    %304 = vst [vmem:[#allocation5 + $0x1d8] sm:$0xff] %v240
    %305 = vst [vmem:[#allocation5 + $0x1e0] sm:$0xff] %v241
    %306 = vst [vmem:[#allocation5 + $0x1e8] sm:$0xff] %v242
    %307 = vst [vmem:[#allocation5 + $0x1f0] sm:$0xff] %v243
    %308 = vst [vmem:[#allocation5 + $0x1f8] sm:$0xff] %v244
    // Predicated region
    $region18: #{tpu_custom_call.1} parent=1 // pred_check
      _
    $region19: #{tpu_custom_call.1} parent=1 // pred_check_branch
      %310 = sbr.rel (0) target = $region21
    $region20: #{tpu_custom_call.1} parent=1 // pred_region
      %s312 = ssub.s32 8192, 8192
      %313 = vsyncadd [#allocation4], %s312
      %s315 = sshll.u32 [#allocation5], 4
      %s316 = int_to_ptr.vmem [resolvable:$true] %s315
      %318 = dma.vmem_to_hbm [thread:$0]  %s316, 8192, %s3, [#allocation4]
    $region21: #{tpu_custom_call.1} parent=1 // pred_fallthru
      _
    // Predicated region
    $region22: #{tpu_custom_call.1} parent=1 // pred_check
      _
    $region23: #{tpu_custom_call.1} parent=1 // pred_check_branch
      %320 = sbr.rel (0) target = $region25
    $region24: #{tpu_custom_call.1} parent=1 // pred_region
      %321 = dma.done [#allocation4], 8192
    $region25: #{tpu_custom_call.1} parent=1 // pred_fallthru
      _
    %322 = vsyncpa [#allocation3], 1
    %323 = vsyncpa [#allocation4], 1

</llo_original>
